<compile_context>
chip_gen: v6e
topology: v6e:2x2x1
jax: 0.10.0
libtpu: 0.0.40
codegen_flags: <defaults>
</compile_context>

<pallas_src>
import functools

import jax
import jax.numpy as jnp
from jax import lax
from jax.experimental import pallas as pl
from jax.experimental.pallas import tpu as pltpu

_INV_SQRT2 = 0.7071067811865476  # 1/sqrt(2), Python float (no captured array)


def _transform_kernel(x_ref, w_ref, p_ref, o_ref, *, eps):
    x = x_ref[...]
    w = w_ref[...]
    # Fast bf16 MXU path: cast the LHS row tile to the weight dtype in-kernel
    # (cheap VPU cast hidden under the matmul; avoids an extra HBM pass).
    if x.dtype != w.dtype:
        x = x.astype(w.dtype)
    h = jnp.dot(x, w, preferred_element_type=jnp.float32)

    p = p_ref[...]                       # (3, H) f32: [dense bias; ln gamma; ln beta]
    h = h + p[0:1, :]

    # Exact GELU (erf form), matching PyTorch's gelu.
    # NOTE: lax.erf lowers to a VALU polynomial (not an EUP op); kept exact for
    # numerical parity with the reference module.
    h = 0.5 * h * (1.0 + lax.erf(h * _INV_SQRT2))

    # LayerNorm over hidden: two independent reductions (E[h], E[h^2]), biased
    # variance clamped at 0, affine folded into a single mul + add epilogue.
    mean = jnp.mean(h, axis=-1, keepdims=True)
    mean_sq = jnp.mean(h * h, axis=-1, keepdims=True)
    var = jnp.maximum(mean_sq - mean * mean, 0.0)
    inv = lax.rsqrt(var + eps)
    scale = inv * p[1:2, :]
    shift = p[2:3, :] - mean * scale
    o_ref[...] = (h * scale + shift).astype(o_ref.dtype)


def _round_up(x, m):
    return -(-x // m) * m


def _cdiv(a, b):
    return -(-a // b)


def smith_prediction_head_transform(hidden_states, params, *, eps=1e-12,
                                    matmul_dtype=jnp.bfloat16,
                                    vmem_budget_bytes=48 * 1024 * 1024):
    """hidden_states: [batch, seq, hidden] -> transformed [batch, seq, hidden]."""
    B, S, H = hidden_states.shape
    out_dtype = hidden_states.dtype

    w = params["w_dense_t"]                       # [H, H], pre-transposed (x @ W^T)
    if matmul_dtype is not None and w.dtype != matmul_dtype:
        w = w.astype(matmul_dtype)                # one-time cast; bf16 halves resident VMEM

    # Pack bias / gamma / beta into one (3, H) f32 operand (one buffer, one DMA).
    packed = jnp.concatenate(
        [params["b_dense"].reshape(1, H).astype(jnp.float32),
         params["ln_gamma"].reshape(1, H).astype(jnp.float32),
         params["ln_beta"].reshape(1, H).astype(jnp.float32)], axis=0)

    M = B * S
    x2d = hidden_states.reshape(M, H)

    sublane = 8 if out_dtype == jnp.float32 else 16
    x_item = jnp.dtype(out_dtype).itemsize
    w_bytes = H * H * jnp.dtype(w.dtype).itemsize
    p_bytes = 3 * H * 4

    def footprint(tm):
        # single-buffered constants + double-buffered x / out row tiles
        return w_bytes + p_bytes + 2 * tm * H * x_item + 2 * tm * H * x_item

    # Row tile: large enough to amortize per-step overhead and feed the MXU, small
    # enough to fit the (v7x-safe) VMEM budget.
    tm = 512 if H <= 1536 else 256
    tm = min(tm, _round_up(M, sublane))
    tm = _round_up(tm, sublane)
    while tm > sublane and footprint(tm) > vmem_budget_bytes:
        tm = max(sublane, _round_up(tm // 2, sublane))
    # Keep >= ~8 grid steps (>= 4 per v7x TensorCore) when there is enough work.
    if _cdiv(M, tm) < 8:
        tm_alt = _round_up(_cdiv(M, 8), sublane)
        if tm_alt >= 128:
            tm = min(tm, _round_up(tm_alt, 128))

    grid = (pl.cdiv(M, tm),)   # ragged last block handled by Pallas (no pad / slice)

    vmem_limit = int(min(max(footprint(tm) + (8 << 20), 16 << 20), 56 << 20))

    # TODO(synk): for very large hidden sizes (H*H*itemsize ~ 1/3 of per-core VMEM,
    # i.e. H >= ~2048 f32 / ~2800 bf16 on v7x's 64 MiB/TC), add a K grid axis
    # ((tm, tk) x (tk, H)) with an f32 VMEM accumulator instead of keeping the whole
    # [H, H] weight resident.

    kernel = functools.partial(_transform_kernel, eps=float(eps))

    cost = pl.CostEstimate(
        flops=2 * M * H * H + 10 * M * H,
        transcendentals=M * H,
        bytes_accessed=2 * M * H * x_item + w_bytes + p_bytes,
    )

    out2d = pl.pallas_call(
        kernel,
        out_shape=jax.ShapeDtypeStruct((M, H), out_dtype),
        grid_spec=pltpu.PrefetchScalarGridSpec(
            num_scalar_prefetch=0,
            grid=grid,
            in_specs=[
                # x row tile: pipelined / double-buffered over the row grid
                pl.BlockSpec((tm, H), lambda i: (i, 0)),
                # constants: single-buffered (index_map is (0,0) every step)
                pl.BlockSpec((H, H), lambda i: (0, 0), pipeline_mode=pl.Buffered(1)),
                pl.BlockSpec((3, H), lambda i: (0, 0), pipeline_mode=pl.Buffered(1)),
            ],
            out_specs=pl.BlockSpec((tm, H), lambda i: (i, 0)),
        ),
        compiler_params=pltpu.CompilerParams(
            dimension_semantics=("parallel",),
            vmem_limit_bytes=vmem_limit,
        ),
        cost_estimate=cost,
    )(x2d, w, packed)

    return out2d.reshape(B, S, H)


def _reference(hidden_states, params, eps=1e-12):
    x = hidden_states.astype(jnp.float32)
    h = x @ params["w_dense_t"].astype(jnp.float32) + params["b_dense"]
    h = 0.5 * h * (1.0 + lax.erf(h / jnp.sqrt(2.0)))
    mean = jnp.mean(h, axis=-1, keepdims=True)
    var = jnp.mean((h - mean) ** 2, axis=-1, keepdims=True)
    h = (h - mean) / jnp.sqrt(var + eps) * params["ln_gamma"] + params["ln_beta"]
    return h.astype(hidden_states.dtype)


if __name__ == "__main__":
    # Small config consistent with the module: hidden_size=32, batch=2, seq=8,
    # layer_norm_epsilon=1e-12, hidden_act="gelu".
    B, S, H = 2, 8, 32
    eps = 1e-12

    key = jax.random.PRNGKey(0)
    kx, kw1, kb1, kg, kb = jax.random.split(key, 5)

    hidden_states = jax.random.normal(kx, (B, S, H), dtype=jnp.float32)
    params = {
        # nn.Linear(hidden, hidden): weight [H, H]; stored transposed [in, out]
        "w_dense_t": jax.random.normal(kw1, (H, H), dtype=jnp.float32) * 0.02,
        "b_dense": jax.random.normal(kb1, (1, H), dtype=jnp.float32) * 0.02,
        "ln_gamma": 1.0 + 0.1 * jax.random.normal(kg, (1, H), dtype=jnp.float32),
        "ln_beta": 0.1 * jax.random.normal(kb, (1, H), dtype=jnp.float32),
    }

    ref = _reference(hidden_states, params, eps=eps)

    # Exact f32 matmul path: tight check against the f32 reference.
    out_f32 = smith_prediction_head_transform(
        hidden_states, params, eps=eps, matmul_dtype=jnp.float32)
    out_f32 = jax.block_until_ready(out_f32)
    assert out_f32.shape == (B, S, H)
    assert jnp.allclose(out_f32, ref, atol=1e-5, rtol=1e-5), "f32 path mismatch"

    # Default fast bf16-MXU path: looser tolerance vs the exact-f32 reference.
    out_bf16 = smith_prediction_head_transform(hidden_states, params, eps=eps)
    out_bf16 = jax.block_until_ready(out_bf16)
    assert out_bf16.shape == (B, S, H)
    assert jnp.allclose(out_bf16, ref, atol=5e-2, rtol=5e-2), "bf16 path mismatch"

    print("KERNEL_OK")
</pallas_src>

<mosaic_0001>
module attributes {stable_mosaic.version = 11 : i64} {
  func.func @_transform_kernel(%arg0: i32, %arg1: memref<16x32xf32, #tpu.memory_space<vmem>>, %arg2: memref<32x32xf32, #tpu.memory_space<vmem>>, %arg3: memref<3x32xf32, #tpu.memory_space<vmem>>, %arg4: memref<16x32xf32, #tpu.memory_space<vmem>>) attributes {dimension_semantics = [#tpu.dimension_semantics<parallel>], iteration_bounds = array<i64: 1>, scalar_prefetch = 0 : i64, scratch_operands = 0 : i64, tpu.core_type = #tpu.core_type<tc>, window_params = [{transform_indices = @transform_0, window_bounds = array<i64: 16, 32>}, {pipeline_mode = #tpu.pipeline_mode<synchronous>, transform_indices = @transform_1, window_bounds = array<i64: 32, 32>}, {pipeline_mode = #tpu.pipeline_mode<synchronous>, transform_indices = @transform_2, window_bounds = array<i64: 3, 32>}, {transform_indices = @transform_3, window_bounds = array<i64: 16, 32>}]} {
    %c0 = arith.constant 0 : index
    %c0_0 = arith.constant 0 : index
    %0 = vector.load %arg1[%c0, %c0_0] : memref<16x32xf32, #tpu.memory_space<vmem>>, vector<16x32xf32>
    %c0_1 = arith.constant 0 : index
    %c0_2 = arith.constant 0 : index
    %1 = vector.load %arg2[%c0_1, %c0_2] : memref<32x32xf32, #tpu.memory_space<vmem>>, vector<32x32xf32>
    %cst = arith.constant dense<0.000000e+00> : vector<16x32xf32>
    %2 = tpu.matmul %0, %1, %cst {dimension_numbers = #tpu.dot_dimension_numbers<[1], [0], [0], [1], [0, 0, 1, 1], [], []>} : vector<16x32xf32>, vector<32x32xf32>, vector<16x32xf32> -> vector<16x32xf32>
    %c0_3 = arith.constant 0 : index
    %c0_4 = arith.constant 0 : index
    %3 = vector.load %arg3[%c0_3, %c0_4] : memref<3x32xf32, #tpu.memory_space<vmem>>, vector<3x32xf32>
    %4 = vector.extract_strided_slice %3 {offsets = [0, 0], sizes = [1, 32], strides = [1, 1]} : vector<3x32xf32> to vector<1x32xf32>
    %5 = vector.broadcast %4 : vector<1x32xf32> to vector<16x32xf32>
    %6 = arith.addf %2, %5 : vector<16x32xf32>
    %cst_5 = arith.constant 5.000000e-01 : f32
    %7 = vector.broadcast %cst_5 : f32 to vector<16x32xf32>
    %8 = arith.mulf %7, %6 : vector<16x32xf32>
    %cst_6 = arith.constant 0.707106769 : f32
    %9 = vector.broadcast %cst_6 : f32 to vector<16x32xf32>
    %10 = arith.mulf %6, %9 : vector<16x32xf32>
    %11 = math.erf %10 : vector<16x32xf32>
    %cst_7 = arith.constant 1.000000e+00 : f32
    %12 = vector.broadcast %cst_7 : f32 to vector<16x32xf32>
    %13 = arith.addf %12, %11 : vector<16x32xf32>
    %14 = arith.mulf %8, %13 : vector<16x32xf32>
    %cst_8 = arith.constant dense<0.000000e+00> : vector<16xf32>
    %15 = vector.multi_reduction <add>, %14, %cst_8 [1] : vector<16x32xf32> to vector<16xf32>
    %16 = vector.shape_cast %15 : vector<16xf32> to vector<16x1xf32>
    %cst_9 = arith.constant 3.200000e+01 : f32
    %17 = vector.broadcast %cst_9 : f32 to vector<16x1xf32>
    %18 = arith.divf %16, %17 : vector<16x1xf32>
    %19 = arith.mulf %14, %14 : vector<16x32xf32>
    %cst_10 = arith.constant dense<0.000000e+00> : vector<16xf32>
    %20 = vector.multi_reduction <add>, %19, %cst_10 [1] : vector<16x32xf32> to vector<16xf32>
    %21 = vector.shape_cast %20 : vector<16xf32> to vector<16x1xf32>
    %cst_11 = arith.constant 3.200000e+01 : f32
    %22 = vector.broadcast %cst_11 : f32 to vector<16x1xf32>
    %23 = arith.divf %21, %22 : vector<16x1xf32>
    %24 = arith.mulf %18, %18 : vector<16x1xf32>
    %25 = arith.subf %23, %24 : vector<16x1xf32>
    %cst_12 = arith.constant 0.000000e+00 : f32
    %26 = vector.broadcast %cst_12 : f32 to vector<16x1xf32>
    %27 = arith.maximumf %25, %26 : vector<16x1xf32>
    %cst_13 = arith.constant 9.99999996E-13 : f32
    %28 = vector.broadcast %cst_13 : f32 to vector<16x1xf32>
    %29 = arith.addf %27, %28 : vector<16x1xf32>
    %30 = math.rsqrt %29 : vector<16x1xf32>
    %31 = vector.extract_strided_slice %3 {offsets = [1, 0], sizes = [1, 32], strides = [1, 1]} : vector<3x32xf32> to vector<1x32xf32>
    %32 = vector.broadcast %30 : vector<16x1xf32> to vector<16x32xf32>
    %33 = vector.broadcast %31 : vector<1x32xf32> to vector<16x32xf32>
    %34 = arith.mulf %32, %33 : vector<16x32xf32>
    %35 = vector.extract_strided_slice %3 {offsets = [2, 0], sizes = [1, 32], strides = [1, 1]} : vector<3x32xf32> to vector<1x32xf32>
    %36 = vector.broadcast %18 : vector<16x1xf32> to vector<16x32xf32>
    %37 = arith.mulf %36, %34 : vector<16x32xf32>
    %38 = vector.broadcast %35 : vector<1x32xf32> to vector<16x32xf32>
    %39 = arith.subf %38, %37 : vector<16x32xf32>
    %40 = arith.mulf %14, %34 : vector<16x32xf32>
    %41 = arith.addf %40, %39 : vector<16x32xf32>
    %c0_14 = arith.constant 0 : index
    %c0_15 = arith.constant 0 : index
    %42 = vector.load %arg4[%c0_14, %c0_15] : memref<16x32xf32, #tpu.memory_space<vmem>>, vector<16x32xf32>
    tpu.vector_store %arg4[%c0_14, %c0_15], %41 {strides = array<i32>} : memref<16x32xf32, #tpu.memory_space<vmem>>, vector<16x32xf32>,
    return
  }
  func.func @transform_0(%arg0: i32) -> (i32, i32) {
    %c0_i32 = arith.constant 0 : i32
    %c0_i32_0 = arith.constant 0 : i32
    return %arg0, %c0_i32 : i32, i32
  }
  func.func @transform_1(%arg0: i32) -> (i32, i32) {
    %c0_i32 = arith.constant 0 : i32
    %c0_i32_0 = arith.constant 0 : i32
    %c0_i32_1 = arith.constant 0 : i32
    return %c0_i32, %c0_i32_0 : i32, i32
  }
  func.func @transform_2(%arg0: i32) -> (i32, i32) {
    %c0_i32 = arith.constant 0 : i32
    %c0_i32_0 = arith.constant 0 : i32
    %c0_i32_1 = arith.constant 0 : i32
    return %c0_i32, %c0_i32_0 : i32, i32
  }
  func.func @transform_3(%arg0: i32) -> (i32, i32) {
    %c0_i32 = arith.constant 0 : i32
    %c0_i32_0 = arith.constant 0 : i32
    return %arg0, %c0_i32 : i32, i32
  }
}

</mosaic_0001>

<llo_original>
// kernel: tpu_custom_call.1
$region0: #{tpu_custom_call.1}
  #allocation0 [shape = 'u32[]', space=smem, size = 0x4, offset = 0x4, fixed_abs, tag = 'smem constant byte address 0x4 - core index']
  #allocation1 [shape = 'u32[144,128]{1,0:T(1,128)}', space=vmem, size = 0x12000, scoped, tag = 'internal scratch']
  %s0 = inlined_call_operand.hbm [shape: f32[16,32], index: 0, kind: input, shape index: {}]
  %s1 = inlined_call_operand.hbm [shape: f32[32,32], index: 1, kind: input, shape index: {}]
  %s2 = inlined_call_operand.hbm [shape: f32[3,32], index: 2, kind: input, shape index: {}]
  %s3 = inlined_call_operand.hbm [shape: f32[16,32], index: 3, kind: output, shape index: {}]
  %s4 = sld [smem:[#allocation0]]
  $region34: #{tpu_custom_call.1} parent=0
    _
  %s6 = ssub.s32 1, %s4
  %s7 = scalar_select 0, %s6, %s4
  $region1: #{tpu_custom_call.1} parent=0
    #allocation2 [shape = 'u8[8192]{0}', space=vmem, size = 0x2000, scoped, tag = 'input window, operand 0, single buffered']
    #allocation3 [shape = 's32[1]{0}', space=sflag, size = 0x4, scoped, tag = 'scoped memory for tpu_custom_call.1']
    #allocation4 [shape = 's32[1]{0}', space=sflag, size = 0x4, scoped, tag = 'scoped memory for tpu_custom_call.1']
    #allocation5 [shape = 'u8[16384]{0}', space=vmem, size = 0x4000, scoped, tag = 'input window, operand 1, single buffered']
    #allocation6 [shape = 's32[1]{0}', space=sflag, size = 0x4, scoped, tag = 'scoped memory for tpu_custom_call.1']
    #allocation7 [shape = 'u8[2048]{0}', space=vmem, size = 0x800, scoped, tag = 'input window, operand 2, single buffered']
    #allocation8 [shape = 'u8[8192]{0}', space=vmem, size = 0x2000, scoped, tag = 'output window, operand 0, single buffered']
    %8 = vsyncpa [#allocation3], 0
    %9 = vsyncpa [#allocation6], 0
    %10 = vsyncpa [#allocation4], 0
    // Predicated region
    $region2: #{tpu_custom_call.1} parent=1 // pred_check
      _
    $region3: #{tpu_custom_call.1} parent=1 // pred_check_branch
      %12 = sbr.rel (0) target = $region5
    $region4: #{tpu_custom_call.1} parent=1 // pred_region
      %s14 = ssub.s32 256, 256
      %15 = vsyncadd [#allocation3], %s14
      %s16 = sshll.u32 [#allocation2], 4
      %s17 = int_to_ptr.vmem [resolvable:$true] %s16
      %22 = dma.hbm_to_vmem [thread:$0]  %s0, 256, %s17, [#allocation3], 128, 128, 8
    $region5: #{tpu_custom_call.1} parent=1 // pred_fallthru
      _
    // Predicated region
    $region6: #{tpu_custom_call.1} parent=1 // pred_check
      _
    $region7: #{tpu_custom_call.1} parent=1 // pred_check_branch
      %24 = sbr.rel (0) target = $region9
    $region8: #{tpu_custom_call.1} parent=1 // pred_region
      %s26 = ssub.s32 512, 512
      %27 = vsyncadd [#allocation6], %s26
      %s28 = sshll.u32 [#allocation5], 4
      %s29 = int_to_ptr.vmem [resolvable:$true] %s28
      %34 = dma.hbm_to_vmem [thread:$0]  %s1, 512, %s29, [#allocation6], 128, 128, 8
    $region9: #{tpu_custom_call.1} parent=1 // pred_fallthru
      _
    // Predicated region
    $region10: #{tpu_custom_call.1} parent=1 // pred_check
      _
    $region11: #{tpu_custom_call.1} parent=1 // pred_check_branch
      %36 = sbr.rel (0) target = $region13
    $region12: #{tpu_custom_call.1} parent=1 // pred_region
      %s38 = ssub.s32 64, 64
      %39 = vsyncadd [#allocation6], %s38
      %s41 = sshll.u32 [#allocation7], 4
      %s42 = int_to_ptr.vmem [resolvable:$true] %s41
      %44 = dma.hbm_to_vmem [thread:$0]  %s2, 64, %s42, [#allocation6]
    $region13: #{tpu_custom_call.1} parent=1 // pred_fallthru
      _
    // Predicated region
    $region14: #{tpu_custom_call.1} parent=1 // pred_check
      _
    $region15: #{tpu_custom_call.1} parent=1 // pred_check_branch
      %46 = sbr.rel (0) target = $region17
    $region16: #{tpu_custom_call.1} parent=1 // pred_region
      %47 = dma.done [#allocation3], 256
    $region17: #{tpu_custom_call.1} parent=1 // pred_fallthru
      _
    // Predicated region
    $region18: #{tpu_custom_call.1} parent=1 // pred_check
      _
    $region19: #{tpu_custom_call.1} parent=1 // pred_check_branch
      %49 = sbr.rel (0) target = $region21
    $region20: #{tpu_custom_call.1} parent=1 // pred_region
      %50 = dma.done [#allocation6], 512
    $region21: #{tpu_custom_call.1} parent=1 // pred_fallthru
      _
    // Predicated region
    $region22: #{tpu_custom_call.1} parent=1 // pred_check
      _
    $region23: #{tpu_custom_call.1} parent=1 // pred_check_branch
      %52 = sbr.rel (0) target = $region25
    $region24: #{tpu_custom_call.1} parent=1 // pred_region
      %53 = dma.done [#allocation6], 64
    $region25: #{tpu_custom_call.1} parent=1 // pred_fallthru
      _
    %v54 = vld [vmem:[#allocation2] sm:$0xff]
    %v55 = vld [vmem:[#allocation2 + $0x8] sm:$0xff]
    %v56 = vld [vmem:[#allocation5] sm:$0xff]
    %v57 = vld [vmem:[#allocation5 + $0x8] sm:$0xff]
    %v58 = vld [vmem:[#allocation5 + $0x10] sm:$0xff]
    %v59 = vld [vmem:[#allocation5 + $0x18] sm:$0xff]
    %v60 = vld [vmem:[#allocation7] sm:$0x7]
    %v61 = vlaneseq
    %v62 = vshrl.u32 %v61, 7
    %v63 = vsub.s32 0, %v62
    %v64 = vrot.slane %v60, %v63
    %vm65 = vcmask 261120
    %v67 = vsel %vm65, %v54, 0
    %v70 = vsel %vm65, %v55, 0
    %72 = vmatprep.subr.mxu0 0.0
    %73 = vmatpush1.msra.mxu0 0.0
    %74 = vmatprep.subr.mxu0 0.0
    %75 = vmatpush1.msra.mxu0 0.0
    %76 = vmatprep.subr.mxu0 0.0
    %77 = vmatpush1.msra.mxu0 0.0
    %78 = vmatprep.subr.mxu0 0.0
    %79 = vmatpush1.msra.mxu0 0.0
    %80 = vmatprep.subr.mxu0 0.0
    %81 = vmatpush1.msra.mxu0 0.0
    %82 = vmatprep.subr.mxu0 0.0
    %83 = vmatpush1.msra.mxu0 0.0
    %84 = vmatprep.subr.mxu0 0.0
    %85 = vmatpush1.msra.mxu0 0.0
    %86 = vmatprep.subr.mxu0 0.0
    %87 = vmatpush1.msra.mxu0 0.0
    %88 = vmatprep.subr.mxu0 0.0
    %89 = vmatpush1.msra.mxu0 0.0
    %90 = vmatprep.subr.mxu0 0.0
    %91 = vmatpush1.msra.mxu0 0.0
    %92 = vmatprep.subr.mxu0 0.0
    %93 = vmatpush1.msra.mxu0 0.0
    %94 = vmatprep.subr.mxu0 0.0
    %95 = vmatpush1.msra.mxu0 0.0
    %96 = vmatprep.subr.mxu0 0.0
    %97 = vmatpush1.msra.mxu0 %v59
    %98 = vmatprep.subr.mxu0 0.0
    %99 = vmatpush1.msra.mxu0 %v58
    %100 = vmatprep.subr.mxu0 0.0
    %101 = vmatpush1.msra.mxu0 %v57
    %102 = vmatprep.subr.mxu0 0.0
    %103 = vmatpush1.msra.mxu0 %v56
    %104 = vmatprep.subr.mxu0 0.0
    %105 = vmatpush2.msra.mxu0 0.0
    %106 = vmatprep.subr.mxu0 0.0
    %107 = vmatpush2.msra.mxu0 0.0
    %108 = vmatprep.subr.mxu0 0.0
    %109 = vmatpush2.msra.mxu0 0.0
    %110 = vmatprep.subr.mxu0 0.0
    %111 = vmatpush2.msra.mxu0 0.0
    %112 = vmatprep.subr.mxu0 0.0
    %113 = vmatpush2.msra.mxu0 0.0
    %114 = vmatprep.subr.mxu0 0.0
    %115 = vmatpush2.msra.mxu0 0.0
    %116 = vmatprep.subr.mxu0 0.0
    %117 = vmatpush2.msra.mxu0 0.0
    %118 = vmatprep.subr.mxu0 0.0
    %119 = vmatpush2.msra.mxu0 0.0
    %120 = vmatprep.subr.mxu0 0.0
    %121 = vmatpush2.msra.mxu0 0.0
    %122 = vmatprep.subr.mxu0 0.0
    %123 = vmatpush2.msra.mxu0 0.0
    %124 = vmatprep.subr.mxu0 0.0
    %125 = vmatpush2.msra.mxu0 0.0
    %126 = vmatprep.subr.mxu0 0.0
    %127 = vmatpush2.msra.mxu0 0.0
    %128 = vmatprep.subr.mxu0 0.0
    %129 = vmatpush2.msra.mxu0 0.0
    %130 = vmatprep.subr.mxu0 0.0
    %131 = vmatpush2.msra.mxu0 0.0
    %132 = vmatprep.subr.mxu0 0.0
    %133 = vmatpush2.msra.mxu0 0.0
    %134 = vmatprep.subr.mxu0 0.0
    %135 = vmatpush2.msra.mxu0 0.0
    %136 = vmatprep.mubr.f32.mxu0 0.0
    %137 = vmatmul.mubr.f32.gmra.mxu0 %v67
    %v138 = vpop.f32.mrf.mxu0
    %v139 = vadd.f32 %v64, %v138
    %v140 = vpop.f32.mrf.mxu0
    %141 = vmatprep.mubr.f32.mxu0 0.0
    %142 = vmatmul.mubr.f32.gmra.mxu0 %v70
    %v143 = vpop.f32.mrf.mxu0
    %v144 = vadd.f32 %v64, %v143
    %v145 = vpop.f32.mrf.mxu0
    %146 = vdwg.mxu0
    %v147 = vmul.f32 %v139, 0.5
    %v148 = vmul.f32 %v144, 0.5
    %v149 = vmul.f32 %v139, 0.70710677
    %v150 = vmul.f32 %v144, 0.70710677
    %v151 = verf.f32.pop %v149
    %v152 = verf.f32.pop %v150
    %v153 = vadd.f32 %v151, 1.0
    %v154 = vadd.f32 %v152, 1.0
    %v155 = vmul.f32 %v147, %v153
    %v156 = vmul.f32 %v148, %v154
    %v157 = vsel %vm65, %v155, 0.0
    %158 = vadd.xlane.f32.xlu0 %v157
    %v159 = vpop.xlane.xlu0 %158
    %v160 = vsel %vm65, %v156, 0.0
    %161 = vadd.xlane.f32.xlu0 %v160
    %v162 = vpop.xlane.xlu0 %161
    %v163 = vrcp.pop 32.0
    %v164 = vmul.f32 %v159, %v163
    %v165 = vmul.f32 %v162, %v163
    %v166 = vmul.f32 %v155, %v155
    %v167 = vmul.f32 %v156, %v156
    %v168 = vsel %vm65, %v166, 0.0
    %169 = vadd.xlane.f32.xlu0 %v168
    %v170 = vpop.xlane.xlu0 %169
    %v171 = vsel %vm65, %v167, 0.0
    %172 = vadd.xlane.f32.xlu0 %v171
    %v173 = vpop.xlane.xlu0 %172
    %v174 = vmul.f32 %v170, %v163
    %v175 = vmul.f32 %v173, %v163
    %v176 = vmul.f32 %v164, %v164
    %v177 = vmul.f32 %v165, %v165
    %v178 = vsub.f32 %v174, %v176
    %v179 = vsub.f32 %v175, %v177
    %v180 = vmax.f32 %v178, 0.0
    %v181 = vmax.f32 %v179, 0.0
    %v182 = vadd.f32 %v180, 1e-12
    %v183 = vadd.f32 %v181, 1e-12
    %v184 = vrsqrt.pop %v182
    %v185 = vrsqrt.pop %v183
    %v186 = vlaneseq
    %v187 = vshrl.u32 %v186, 7
    %v188 = vsub.s32 1, %v187
    %v189 = vrot.slane %v60, %v188
    %v190 = vmul.f32 %v184, %v189
    %v191 = vmul.f32 %v185, %v189
    %v192 = vmul.f32 %v164, %v190
    %v193 = vmul.f32 %v165, %v191
    %v194 = vlaneseq
    %v195 = vshrl.u32 %v194, 7
    %v196 = vsub.s32 2, %v195
    %v197 = vrot.slane %v60, %v196
    %v198 = vsub.f32 %v197, %v192
    %v199 = vsub.f32 %v197, %v193
    %v200 = vmul.f32 %v155, %v190
    %v201 = vmul.f32 %v156, %v191
    %v202 = vadd.f32 %v200, %v198
    %v203 = vadd.f32 %v201, %v199
    %204 = vst.msk [vmem:[#allocation8] sm:$0xff] %vm65, %v202
    %205 = vst.msk [vmem:[#allocation8 + $0x8] sm:$0xff] %vm65, %v203
    // Predicated region
    $region26: #{tpu_custom_call.1} parent=1 // pred_check
      _
    $region27: #{tpu_custom_call.1} parent=1 // pred_check_branch
      %207 = sbr.rel (0) target = $region29
    $region28: #{tpu_custom_call.1} parent=1 // pred_region
      %s209 = ssub.s32 256, 256
      %210 = vsyncadd [#allocation4], %s209
      %s211 = sshll.u32 [#allocation8], 4
      %s212 = int_to_ptr.vmem [resolvable:$true] %s211
      %217 = dma.vmem_to_hbm [thread:$0]  %s212, 256, %s3, [#allocation4], 128, 128, 8
    $region29: #{tpu_custom_call.1} parent=1 // pred_fallthru
      _
    // Predicated region
    $region30: #{tpu_custom_call.1} parent=1 // pred_check
      _
    $region31: #{tpu_custom_call.1} parent=1 // pred_check_branch
      %219 = sbr.rel (0) target = $region33
    $region32: #{tpu_custom_call.1} parent=1 // pred_region
      %220 = dma.done [#allocation4], 256
    $region33: #{tpu_custom_call.1} parent=1 // pred_fallthru
      _
    %221 = vsyncpa [#allocation3], 1
    %222 = vsyncpa [#allocation6], 1
    %223 = vsyncpa [#allocation4], 1

</llo_original>
